<compile_context>
chip_gen: v7x
topology: tpu7x:2x2x1
jax: 0.10.0
libtpu: 0.0.40
codegen_flags: <defaults>
</compile_context>

<pallas_src>
import functools

import jax
import jax.numpy as jnp
from jax.experimental import pallas as pl
from jax.experimental.pallas import tpu as pltpu


def conv_bn_relu_kernel(x_ref, w_ref, scale_ref, bias_ref, o_ref, patch_ref, *,
                        wp, l_pad, cin_pad):
    # x_ref:     (N, Cin_pad, Hp*Wp)   flattened zero-padded images (bf16)
    # w_ref:     (Cout, 9*Cin_pad)     unscaled weights, col = (dy*3+dx)*Cin_pad + c
    # scale_ref: (Cout, 1)             BN scale gamma/sqrt(var+eps)      (f32)
    # bias_ref:  (Cout, 1)             BN bias  beta - mean*scale        (f32)
    # o_ref:     (N, Cout, L_pad)      lane-dense output (junk lanes sliced by wrapper)
    # patch_ref: (9*Cin_pad, N*L_pad)  im2col slab (VMEM scratch, bf16)
    n_img = x_ref.shape[0]

    # Stage the im2col slab.  Every 3x3 tap is a pure lane shift of the
    # flattened padded image; each write is a full (16-sublane, 384-lane)
    # aligned slab (cin_pad = bf16 sublane tile, L_pad = multiple of 128),
    # and the whole scratch is overwritten (no uninitialized reads).
    for n in range(n_img):
        for k in range(9):
            dy, dx = divmod(k, 3)
            off = dy * wp + dx
            patch_ref[k * cin_pad:(k + 1) * cin_pad,
                      n * l_pad:(n + 1) * l_pad] = x_ref[n, :, off:off + l_pad]

    # One MXU matmul for the whole batch: (Cout, 9*Cin_pad) x (9*Cin_pad, N*L_pad),
    # f32 accumulation.  MXU rows are <3% utilized here by design (Cout=4);
    # the kernel is overhead/store-bound, not compute-bound.
    acc = jnp.dot(w_ref[...], patch_ref[...], preferred_element_type=jnp.float32)

    # Fused eval-mode BatchNorm (scale+bias on the f32 accumulator) + ReLU.
    y = jnp.maximum(acc * scale_ref[...] + bias_ref[...], 0.0)

    # Per-image lane-aligned stores (n*L_pad is a multiple of 128).
    for n in range(n_img):
        o_ref[n] = y[:, n * l_pad:(n + 1) * l_pad].astype(o_ref.dtype)


def conv_adaptor_forward(x_nchw, w_oihw, gamma, beta, running_mean, running_var,
                         eps=1e-5, compute_dtype=jnp.bfloat16):
    """Pallas implementation of ConvAdaptor.forward (eval-mode BN). NCHW in/out."""
    N, C, H, W = x_nchw.shape
    Cout, Cin, KH, KW = w_oihw.shape
    assert (KH, KW) == (3, 3) and Cin == C and Cout == C

    # Sublane tile for the compute dtype (bf16 packs 16 rows per sublane tile).
    sub = 16 if compute_dtype == jnp.bfloat16 else 8
    cin_pad = ((Cin + sub - 1) // sub) * sub

    Wp = W + 2                               # horizontally padded row length
    L = H * Wp                               # per-image flattened output length
    L_pad = ((L + 127) // 128) * 128         # lane-dense (multiple of 128)
    max_off = 2 * Wp + 2                     # largest tap offset (dy=dx=2)
    # Enough bottom zero rows that every tap slice of length L_pad is in-bounds
    # (and reads only real zero padding, never garbage).
    Hp = max(H + 2, -(-(max_off + L_pad) // Wp))
    flat_len = Hp * Wp

    # ---- glue (plain JAX): BN params + weight repack + input pad/flatten ----
    scale = (gamma / jnp.sqrt(running_var + eps)).astype(jnp.float32)
    bias = (beta - running_mean * scale).astype(jnp.float32)
    scale = scale.reshape(Cout, 1)
    bias = bias.reshape(Cout, 1)

    # (O,C,3,3) -> (O, dy, dx, C) -> zero-pad C -> (Cout, 9*Cin_pad); weights
    # stay UNscaled in bf16 (BN scale applied to the f32 accumulator in-kernel).
    w_t = jnp.transpose(w_oihw, (0, 2, 3, 1))
    w_t = jnp.pad(w_t, ((0, 0), (0, 0), (0, 0), (0, cin_pad - Cin)))
    w_mat = w_t.reshape(Cout, 9 * cin_pad).astype(compute_dtype)

    # SAME padding (top/left/right = 1) + bottom slack rows + channel padding.
    x_pad = jnp.pad(x_nchw, ((0, 0), (0, cin_pad - Cin), (1, Hp - H - 1), (1, 1)))
    x_flat = x_pad.reshape(N, cin_pad, flat_len).astype(compute_dtype)

    kernel = functools.partial(conv_bn_relu_kernel,
                               wp=Wp, l_pad=L_pad, cin_pad=cin_pad)

    out = pl.pallas_call(
        kernel,
        out_shape=jax.ShapeDtypeStruct((N, Cout, L_pad), jnp.float32),
        grid_spec=pltpu.PrefetchScalarGridSpec(
            num_scalar_prefetch=0,
            grid=(1,),                                     # single step: whole batch
            in_specs=[
                pl.BlockSpec((N, cin_pad, flat_len), lambda i: (0, 0, 0)),
                pl.BlockSpec((Cout, 9 * cin_pad), lambda i: (0, 0)),
                pl.BlockSpec((Cout, 1), lambda i: (0, 0)),
                pl.BlockSpec((Cout, 1), lambda i: (0, 0)),
            ],
            out_specs=pl.BlockSpec((N, Cout, L_pad), lambda i: (0, 0, 0)),
            scratch_shapes=[pltpu.VMEM((9 * cin_pad, N * L_pad), compute_dtype)],
        ),
        compiler_params=pltpu.CompilerParams(
            dimension_semantics=("arbitrary",)),
    )(x_flat, w_mat, scale, bias)

    # De-pad: drop the padded lane tail and the 2 junk columns per row.
    # TODO(synk): fuse this slice into the consumer / keep padded layout canonical.
    return out[:, :, :L].reshape(N, Cout, H, Wp)[:, :, :, :W]


def _reference(x_nchw, w_oihw, gamma, beta, running_mean, running_var, eps=1e-5):
    y = jax.lax.conv_general_dilated(
        x_nchw, w_oihw, window_strides=(1, 1), padding="SAME",
        dimension_numbers=("NCHW", "OIHW", "NCHW"))
    scale = gamma / jnp.sqrt(running_var + eps)
    bias = beta - running_mean * scale
    y = y * scale[None, :, None, None] + bias[None, :, None, None]
    return jnp.maximum(y, 0.0)


if __name__ == "__main__":
    key = jax.random.PRNGKey(0)
    k_x, k_w, k_g, k_b, k_m, k_v = jax.random.split(key, 6)

    N, C, H, W = 2, 4, 16, 16                      # out_channels = 4
    x = jax.random.normal(k_x, (N, C, H, W), jnp.float32)
    w = jax.random.normal(k_w, (C, C, 3, 3), jnp.float32) * 0.1   # conv3x3, bias=False
    gamma = 1.0 + 0.1 * jax.random.normal(k_g, (C,), jnp.float32)
    beta = 0.1 * jax.random.normal(k_b, (C,), jnp.float32)
    running_mean = 0.1 * jax.random.normal(k_m, (C,), jnp.float32)
    running_var = 1.0 + 0.1 * jax.random.uniform(k_v, (C,), jnp.float32)

    out = conv_adaptor_forward(x, w, gamma, beta, running_mean, running_var)
    out = jax.block_until_ready(out)

    ref = _reference(x, w, gamma, beta, running_mean, running_var)
    assert out.shape == (N, C, H, W)
    # bf16 activations/weights with f32 accumulation -> loosened tolerance.
    assert jnp.allclose(out, ref, atol=2e-2, rtol=2e-2), "mismatch vs reference"
    print("KERNEL_OK")
</pallas_src>

<mosaic_0001>
module attributes {stable_mosaic.version = 11 : i64} {
  func.func @conv_bn_relu_kernel(%arg0: i32, %arg1: memref<2x16x432xbf16, #tpu.memory_space<vmem>>, %arg2: memref<4x144xbf16, #tpu.memory_space<vmem>>, %arg3: memref<4x1xf32, #tpu.memory_space<vmem>>, %arg4: memref<4x1xf32, #tpu.memory_space<vmem>>, %arg5: memref<2x4x384xf32, #tpu.memory_space<vmem>>, %arg6: memref<144x768xbf16, #tpu.memory_space<vmem>>) attributes {dimension_semantics = [#tpu.dimension_semantics<arbitrary>], iteration_bounds = array<i64: 1>, scalar_prefetch = 0 : i64, scratch_operands = 1 : i64, tpu.core_type = #tpu.core_type<tc>, window_params = [{pipeline_mode = #tpu.pipeline_mode<synchronous>, transform_indices = @transform_0, window_bounds = array<i64: 2, 16, 432>}, {pipeline_mode = #tpu.pipeline_mode<synchronous>, transform_indices = @transform_1, window_bounds = array<i64: 4, 144>}, {pipeline_mode = #tpu.pipeline_mode<synchronous>, transform_indices = @transform_2, window_bounds = array<i64: 4, 1>}, {pipeline_mode = #tpu.pipeline_mode<synchronous>, transform_indices = @transform_3, window_bounds = array<i64: 4, 1>}, {pipeline_mode = #tpu.pipeline_mode<synchronous>, transform_indices = @transform_4, window_bounds = array<i64: 2, 4, 384>}]} {
    %c0 = arith.constant 0 : index
    %c0_0 = arith.constant 0 : index
    %c0_1 = arith.constant 0 : index
    %0 = vector.load %arg1[%c0, %c0_0, %c0_1] : memref<2x16x432xbf16, #tpu.memory_space<vmem>>, vector<1x16x384xbf16>
    %1 = vector.shape_cast %0 : vector<1x16x384xbf16> to vector<16x384xbf16>
    %c0_2 = arith.constant 0 : index
    %c0_3 = arith.constant 0 : index
    %2 = vector.load %arg6[%c0_2, %c0_3] : memref<144x768xbf16, #tpu.memory_space<vmem>>, vector<16x384xbf16>
    tpu.vector_store %arg6[%c0_2, %c0_3], %1 {strides = array<i32>} : memref<144x768xbf16, #tpu.memory_space<vmem>>, vector<16x384xbf16>,
    %c0_4 = arith.constant 0 : index
    %c0_5 = arith.constant 0 : index
    %c1 = arith.constant 1 : index
    %3 = vector.load %arg1[%c0_4, %c0_5, %c1] : memref<2x16x432xbf16, #tpu.memory_space<vmem>>, vector<1x16x384xbf16>
    %4 = vector.shape_cast %3 : vector<1x16x384xbf16> to vector<16x384xbf16>
    %c16 = arith.constant 16 : index
    %c0_6 = arith.constant 0 : index
    %5 = vector.load %arg6[%c16, %c0_6] : memref<144x768xbf16, #tpu.memory_space<vmem>>, vector<16x384xbf16>
    tpu.vector_store %arg6[%c16, %c0_6], %4 {strides = array<i32>} : memref<144x768xbf16, #tpu.memory_space<vmem>>, vector<16x384xbf16>,
    %c0_7 = arith.constant 0 : index
    %c0_8 = arith.constant 0 : index
    %c2 = arith.constant 2 : index
    %6 = vector.load %arg1[%c0_7, %c0_8, %c2] : memref<2x16x432xbf16, #tpu.memory_space<vmem>>, vector<1x16x384xbf16>
    %7 = vector.shape_cast %6 : vector<1x16x384xbf16> to vector<16x384xbf16>
    %c32 = arith.constant 32 : index
    %c0_9 = arith.constant 0 : index
    %8 = vector.load %arg6[%c32, %c0_9] : memref<144x768xbf16, #tpu.memory_space<vmem>>, vector<16x384xbf16>
    tpu.vector_store %arg6[%c32, %c0_9], %7 {strides = array<i32>} : memref<144x768xbf16, #tpu.memory_space<vmem>>, vector<16x384xbf16>,
    %c0_10 = arith.constant 0 : index
    %c0_11 = arith.constant 0 : index
    %c18 = arith.constant 18 : index
    %9 = vector.load %arg1[%c0_10, %c0_11, %c18] : memref<2x16x432xbf16, #tpu.memory_space<vmem>>, vector<1x16x384xbf16>
    %10 = vector.shape_cast %9 : vector<1x16x384xbf16> to vector<16x384xbf16>
    %c48 = arith.constant 48 : index
    %c0_12 = arith.constant 0 : index
    %11 = vector.load %arg6[%c48, %c0_12] : memref<144x768xbf16, #tpu.memory_space<vmem>>, vector<16x384xbf16>
    tpu.vector_store %arg6[%c48, %c0_12], %10 {strides = array<i32>} : memref<144x768xbf16, #tpu.memory_space<vmem>>, vector<16x384xbf16>,
    %c0_13 = arith.constant 0 : index
    %c0_14 = arith.constant 0 : index
    %c19 = arith.constant 19 : index
    %12 = vector.load %arg1[%c0_13, %c0_14, %c19] : memref<2x16x432xbf16, #tpu.memory_space<vmem>>, vector<1x16x384xbf16>
    %13 = vector.shape_cast %12 : vector<1x16x384xbf16> to vector<16x384xbf16>
    %c64 = arith.constant 64 : index
    %c0_15 = arith.constant 0 : index
    %14 = vector.load %arg6[%c64, %c0_15] : memref<144x768xbf16, #tpu.memory_space<vmem>>, vector<16x384xbf16>
    tpu.vector_store %arg6[%c64, %c0_15], %13 {strides = array<i32>} : memref<144x768xbf16, #tpu.memory_space<vmem>>, vector<16x384xbf16>,
    %c0_16 = arith.constant 0 : index
    %c0_17 = arith.constant 0 : index
    %c20 = arith.constant 20 : index
    %15 = vector.load %arg1[%c0_16, %c0_17, %c20] : memref<2x16x432xbf16, #tpu.memory_space<vmem>>, vector<1x16x384xbf16>
    %16 = vector.shape_cast %15 : vector<1x16x384xbf16> to vector<16x384xbf16>
    %c80 = arith.constant 80 : index
    %c0_18 = arith.constant 0 : index
    %17 = vector.load %arg6[%c80, %c0_18] : memref<144x768xbf16, #tpu.memory_space<vmem>>, vector<16x384xbf16>
    tpu.vector_store %arg6[%c80, %c0_18], %16 {strides = array<i32>} : memref<144x768xbf16, #tpu.memory_space<vmem>>, vector<16x384xbf16>,
    %c0_19 = arith.constant 0 : index
    %c0_20 = arith.constant 0 : index
    %c36 = arith.constant 36 : index
    %18 = vector.load %arg1[%c0_19, %c0_20, %c36] : memref<2x16x432xbf16, #tpu.memory_space<vmem>>, vector<1x16x384xbf16>
    %19 = vector.shape_cast %18 : vector<1x16x384xbf16> to vector<16x384xbf16>
    %c96 = arith.constant 96 : index
    %c0_21 = arith.constant 0 : index
    %20 = vector.load %arg6[%c96, %c0_21] : memref<144x768xbf16, #tpu.memory_space<vmem>>, vector<16x384xbf16>
    tpu.vector_store %arg6[%c96, %c0_21], %19 {strides = array<i32>} : memref<144x768xbf16, #tpu.memory_space<vmem>>, vector<16x384xbf16>,
    %c0_22 = arith.constant 0 : index
    %c0_23 = arith.constant 0 : index
    %c37 = arith.constant 37 : index
    %21 = vector.load %arg1[%c0_22, %c0_23, %c37] : memref<2x16x432xbf16, #tpu.memory_space<vmem>>, vector<1x16x384xbf16>
    %22 = vector.shape_cast %21 : vector<1x16x384xbf16> to vector<16x384xbf16>
    %c112 = arith.constant 112 : index
    %c0_24 = arith.constant 0 : index
    %23 = vector.load %arg6[%c112, %c0_24] : memref<144x768xbf16, #tpu.memory_space<vmem>>, vector<16x384xbf16>
    tpu.vector_store %arg6[%c112, %c0_24], %22 {strides = array<i32>} : memref<144x768xbf16, #tpu.memory_space<vmem>>, vector<16x384xbf16>,
    %c0_25 = arith.constant 0 : index
    %c0_26 = arith.constant 0 : index
    %c38 = arith.constant 38 : index
    %24 = vector.load %arg1[%c0_25, %c0_26, %c38] : memref<2x16x432xbf16, #tpu.memory_space<vmem>>, vector<1x16x384xbf16>
    %25 = vector.shape_cast %24 : vector<1x16x384xbf16> to vector<16x384xbf16>
    %c128 = arith.constant 128 : index
    %c0_27 = arith.constant 0 : index
    %26 = vector.load %arg6[%c128, %c0_27] : memref<144x768xbf16, #tpu.memory_space<vmem>>, vector<16x384xbf16>
    tpu.vector_store %arg6[%c128, %c0_27], %25 {strides = array<i32>} : memref<144x768xbf16, #tpu.memory_space<vmem>>, vector<16x384xbf16>,
    %c1_28 = arith.constant 1 : index
    %c0_29 = arith.constant 0 : index
    %c0_30 = arith.constant 0 : index
    %27 = vector.load %arg1[%c1_28, %c0_29, %c0_30] : memref<2x16x432xbf16, #tpu.memory_space<vmem>>, vector<1x16x384xbf16>
    %28 = vector.shape_cast %27 : vector<1x16x384xbf16> to vector<16x384xbf16>
    %c0_31 = arith.constant 0 : index
    %c384 = arith.constant 384 : index
    %29 = vector.load %arg6[%c0_31, %c384] : memref<144x768xbf16, #tpu.memory_space<vmem>>, vector<16x384xbf16>
    tpu.vector_store %arg6[%c0_31, %c384], %28 {strides = array<i32>} : memref<144x768xbf16, #tpu.memory_space<vmem>>, vector<16x384xbf16>,
    %c1_32 = arith.constant 1 : index
    %c0_33 = arith.constant 0 : index
    %c1_34 = arith.constant 1 : index
    %30 = vector.load %arg1[%c1_32, %c0_33, %c1_34] : memref<2x16x432xbf16, #tpu.memory_space<vmem>>, vector<1x16x384xbf16>
    %31 = vector.shape_cast %30 : vector<1x16x384xbf16> to vector<16x384xbf16>
    %c16_35 = arith.constant 16 : index
    %c384_36 = arith.constant 384 : index
    %32 = vector.load %arg6[%c16_35, %c384_36] : memref<144x768xbf16, #tpu.memory_space<vmem>>, vector<16x384xbf16>
    tpu.vector_store %arg6[%c16_35, %c384_36], %31 {strides = array<i32>} : memref<144x768xbf16, #tpu.memory_space<vmem>>, vector<16x384xbf16>,
    %c1_37 = arith.constant 1 : index
    %c0_38 = arith.constant 0 : index
    %c2_39 = arith.constant 2 : index
    %33 = vector.load %arg1[%c1_37, %c0_38, %c2_39] : memref<2x16x432xbf16, #tpu.memory_space<vmem>>, vector<1x16x384xbf16>
    %34 = vector.shape_cast %33 : vector<1x16x384xbf16> to vector<16x384xbf16>
    %c32_40 = arith.constant 32 : index
    %c384_41 = arith.constant 384 : index
    %35 = vector.load %arg6[%c32_40, %c384_41] : memref<144x768xbf16, #tpu.memory_space<vmem>>, vector<16x384xbf16>
    tpu.vector_store %arg6[%c32_40, %c384_41], %34 {strides = array<i32>} : memref<144x768xbf16, #tpu.memory_space<vmem>>, vector<16x384xbf16>,
    %c1_42 = arith.constant 1 : index
    %c0_43 = arith.constant 0 : index
    %c18_44 = arith.constant 18 : index
    %36 = vector.load %arg1[%c1_42, %c0_43, %c18_44] : memref<2x16x432xbf16, #tpu.memory_space<vmem>>, vector<1x16x384xbf16>
    %37 = vector.shape_cast %36 : vector<1x16x384xbf16> to vector<16x384xbf16>
    %c48_45 = arith.constant 48 : index
    %c384_46 = arith.constant 384 : index
    %38 = vector.load %arg6[%c48_45, %c384_46] : memref<144x768xbf16, #tpu.memory_space<vmem>>, vector<16x384xbf16>
    tpu.vector_store %arg6[%c48_45, %c384_46], %37 {strides = array<i32>} : memref<144x768xbf16, #tpu.memory_space<vmem>>, vector<16x384xbf16>,
    %c1_47 = arith.constant 1 : index
    %c0_48 = arith.constant 0 : index
    %c19_49 = arith.constant 19 : index
    %39 = vector.load %arg1[%c1_47, %c0_48, %c19_49] : memref<2x16x432xbf16, #tpu.memory_space<vmem>>, vector<1x16x384xbf16>
    %40 = vector.shape_cast %39 : vector<1x16x384xbf16> to vector<16x384xbf16>
    %c64_50 = arith.constant 64 : index
    %c384_51 = arith.constant 384 : index
    %41 = vector.load %arg6[%c64_50, %c384_51] : memref<144x768xbf16, #tpu.memory_space<vmem>>, vector<16x384xbf16>
    tpu.vector_store %arg6[%c64_50, %c384_51], %40 {strides = array<i32>} : memref<144x768xbf16, #tpu.memory_space<vmem>>, vector<16x384xbf16>,
    %c1_52 = arith.constant 1 : index
    %c0_53 = arith.constant 0 : index
    %c20_54 = arith.constant 20 : index
    %42 = vector.load %arg1[%c1_52, %c0_53, %c20_54] : memref<2x16x432xbf16, #tpu.memory_space<vmem>>, vector<1x16x384xbf16>
    %43 = vector.shape_cast %42 : vector<1x16x384xbf16> to vector<16x384xbf16>
    %c80_55 = arith.constant 80 : index
    %c384_56 = arith.constant 384 : index
    %44 = vector.load %arg6[%c80_55, %c384_56] : memref<144x768xbf16, #tpu.memory_space<vmem>>, vector<16x384xbf16>
    tpu.vector_store %arg6[%c80_55, %c384_56], %43 {strides = array<i32>} : memref<144x768xbf16, #tpu.memory_space<vmem>>, vector<16x384xbf16>,
    %c1_57 = arith.constant 1 : index
    %c0_58 = arith.constant 0 : index
    %c36_59 = arith.constant 36 : index
    %45 = vector.load %arg1[%c1_57, %c0_58, %c36_59] : memref<2x16x432xbf16, #tpu.memory_space<vmem>>, vector<1x16x384xbf16>
    %46 = vector.shape_cast %45 : vector<1x16x384xbf16> to vector<16x384xbf16>
    %c96_60 = arith.constant 96 : index
    %c384_61 = arith.constant 384 : index
    %47 = vector.load %arg6[%c96_60, %c384_61] : memref<144x768xbf16, #tpu.memory_space<vmem>>, vector<16x384xbf16>
    tpu.vector_store %arg6[%c96_60, %c384_61], %46 {strides = array<i32>} : memref<144x768xbf16, #tpu.memory_space<vmem>>, vector<16x384xbf16>,
    %c1_62 = arith.constant 1 : index
    %c0_63 = arith.constant 0 : index
    %c37_64 = arith.constant 37 : index
    %48 = vector.load %arg1[%c1_62, %c0_63, %c37_64] : memref<2x16x432xbf16, #tpu.memory_space<vmem>>, vector<1x16x384xbf16>
    %49 = vector.shape_cast %48 : vector<1x16x384xbf16> to vector<16x384xbf16>
    %c112_65 = arith.constant 112 : index
    %c384_66 = arith.constant 384 : index
    %50 = vector.load %arg6[%c112_65, %c384_66] : memref<144x768xbf16, #tpu.memory_space<vmem>>, vector<16x384xbf16>
    tpu.vector_store %arg6[%c112_65, %c384_66], %49 {strides = array<i32>} : memref<144x768xbf16, #tpu.memory_space<vmem>>, vector<16x384xbf16>,
    %c1_67 = arith.constant 1 : index
    %c0_68 = arith.constant 0 : index
    %c38_69 = arith.constant 38 : index
    %51 = vector.load %arg1[%c1_67, %c0_68, %c38_69] : memref<2x16x432xbf16, #tpu.memory_space<vmem>>, vector<1x16x384xbf16>
    %52 = vector.shape_cast %51 : vector<1x16x384xbf16> to vector<16x384xbf16>
    %c128_70 = arith.constant 128 : index
    %c384_71 = arith.constant 384 : index
    %53 = vector.load %arg6[%c128_70, %c384_71] : memref<144x768xbf16, #tpu.memory_space<vmem>>, vector<16x384xbf16>
    tpu.vector_store %arg6[%c128_70, %c384_71], %52 {strides = array<i32>} : memref<144x768xbf16, #tpu.memory_space<vmem>>, vector<16x384xbf16>,
    %c0_72 = arith.constant 0 : index
    %c0_73 = arith.constant 0 : index
    %54 = vector.load %arg2[%c0_72, %c0_73] : memref<4x144xbf16, #tpu.memory_space<vmem>>, vector<4x144xbf16>
    %c0_74 = arith.constant 0 : index
    %c0_75 = arith.constant 0 : index
    %55 = vector.load %arg6[%c0_74, %c0_75] : memref<144x768xbf16, #tpu.memory_space<vmem>>, vector<144x768xbf16>
    %cst = arith.constant dense<0.000000e+00> : vector<4x768xf32>
    %56 = tpu.matmul %54, %55, %cst {dimension_numbers = #tpu.dot_dimension_numbers<[1], [0], [0], [1], [0, 0, 1, 1], [], []>} : vector<4x144xbf16>, vector<144x768xbf16>, vector<4x768xf32> -> vector<4x768xf32>
    %c0_76 = arith.constant 0 : index
    %c0_77 = arith.constant 0 : index
    %57 = vector.load %arg3[%c0_76, %c0_77] : memref<4x1xf32, #tpu.memory_space<vmem>>, vector<4x1xf32>
    %58 = vector.broadcast %57 : vector<4x1xf32> to vector<4x768xf32>
    %59 = arith.mulf %56, %58 : vector<4x768xf32>
    %c0_78 = arith.constant 0 : index
    %c0_79 = arith.constant 0 : index
    %60 = vector.load %arg4[%c0_78, %c0_79] : memref<4x1xf32, #tpu.memory_space<vmem>>, vector<4x1xf32>
    %61 = vector.broadcast %60 : vector<4x1xf32> to vector<4x768xf32>
    %62 = arith.addf %59, %61 : vector<4x768xf32>
    %cst_80 = arith.constant 0.000000e+00 : f32
    %63 = vector.broadcast %cst_80 : f32 to vector<4x768xf32>
    %64 = arith.maximumf %62, %63 : vector<4x768xf32>
    %65 = vector.extract_strided_slice %64 {offsets = [0, 0], sizes = [4, 384], strides = [1, 1]} : vector<4x768xf32> to vector<4x384xf32>
    %c0_81 = arith.constant 0 : index
    %c0_82 = arith.constant 0 : index
    %c0_83 = arith.constant 0 : index
    %66 = vector.load %arg5[%c0_81, %c0_82, %c0_83] : memref<2x4x384xf32, #tpu.memory_space<vmem>>, vector<1x4x384xf32>
    %67 = vector.shape_cast %66 : vector<1x4x384xf32> to vector<4x384xf32>
    %68 = vector.shape_cast %65 : vector<4x384xf32> to vector<1x4x384xf32>
    tpu.vector_store %arg5[%c0_81, %c0_82, %c0_83], %68 {strides = array<i32>} : memref<2x4x384xf32, #tpu.memory_space<vmem>>, vector<1x4x384xf32>,
    %69 = vector.extract_strided_slice %64 {offsets = [0, 384], sizes = [4, 384], strides = [1, 1]} : vector<4x768xf32> to vector<4x384xf32>
    %c1_84 = arith.constant 1 : index
    %c0_85 = arith.constant 0 : index
    %c0_86 = arith.constant 0 : index
    %70 = vector.load %arg5[%c1_84, %c0_85, %c0_86] : memref<2x4x384xf32, #tpu.memory_space<vmem>>, vector<1x4x384xf32>
    %71 = vector.shape_cast %70 : vector<1x4x384xf32> to vector<4x384xf32>
    %72 = vector.shape_cast %69 : vector<4x384xf32> to vector<1x4x384xf32>
    tpu.vector_store %arg5[%c1_84, %c0_85, %c0_86], %72 {strides = array<i32>} : memref<2x4x384xf32, #tpu.memory_space<vmem>>, vector<1x4x384xf32>,
    return
  }
  func.func @transform_0(%arg0: i32) -> (i32, i32, i32) {
    %c0_i32 = arith.constant 0 : i32
    %c0_i32_0 = arith.constant 0 : i32
    %c0_i32_1 = arith.constant 0 : i32
    %c0_i32_2 = arith.constant 0 : i32
    return %c0_i32, %c0_i32_0, %c0_i32_1 : i32, i32, i32
  }
  func.func @transform_1(%arg0: i32) -> (i32, i32) {
    %c0_i32 = arith.constant 0 : i32
    %c0_i32_0 = arith.constant 0 : i32
    %c0_i32_1 = arith.constant 0 : i32
    return %c0_i32, %c0_i32_0 : i32, i32
  }
  func.func @transform_2(%arg0: i32) -> (i32, i32) {
    %c0_i32 = arith.constant 0 : i32
    %c0_i32_0 = arith.constant 0 : i32
    %c0_i32_1 = arith.constant 0 : i32
    return %c0_i32, %c0_i32_0 : i32, i32
  }
  func.func @transform_3(%arg0: i32) -> (i32, i32) {
    %c0_i32 = arith.constant 0 : i32
    %c0_i32_0 = arith.constant 0 : i32
    %c0_i32_1 = arith.constant 0 : i32
    return %c0_i32, %c0_i32_0 : i32, i32
  }
  func.func @transform_4(%arg0: i32) -> (i32, i32, i32) {
    %c0_i32 = arith.constant 0 : i32
    %c0_i32_0 = arith.constant 0 : i32
    %c0_i32_1 = arith.constant 0 : i32
    %c0_i32_2 = arith.constant 0 : i32
    return %c0_i32, %c0_i32_0, %c0_i32_1 : i32, i32, i32
  }
}

</mosaic_0001>

<llo_original>
// kernel: tpu_custom_call.1
$region0: #{tpu_custom_call.1}
  #allocation0 [shape = 'u32[]', space=smem, size = 0x4, offset = 0x4, fixed_abs, tag = 'smem constant byte address 0x4 - core index']
  #allocation1 [shape = 'u32[144,128]{1,0:T(1,128)}', space=vmem, size = 0x12000, scoped, tag = 'internal scratch']
  #allocation2 [shape = 'bf16[144,768]{1,0:T(16,128)(2,1)}', space=vmem, size = 0x36000, scoped, tag = 'scratch operand']
  %s0 = inlined_call_operand.hbm [shape: bf16[2,16,432], index: 0, kind: input, shape index: {}]
  %s1 = inlined_call_operand.vmem [shape: bf16[4,144], index: 1, kind: input, shape index: {}]
  %s2 = inlined_call_operand.vmem [shape: f32[4,1], index: 2, kind: input, shape index: {}]
  %s3 = inlined_call_operand.vmem [shape: f32[4,1], index: 3, kind: input, shape index: {}]
  %s4 = inlined_call_operand.hbm [shape: f32[2,4,384], index: 4, kind: output, shape index: {}]
  %s5 = sld [smem:[#allocation0]]
  $region30: #{tpu_custom_call.1} parent=0
    _
  %s7 = ssub.s32 1, %s5
  %s8 = scalar_select 0, %s7, %s5
  $region1: #{tpu_custom_call.1} parent=0
    #allocation3 [shape = 'u8[32768]{0}', space=vmem, size = 0x8000, scoped, tag = 'input window, operand 0, single buffered']
    #allocation4 [shape = 's32[1]{0}', space=sflag, size = 0x4, scoped, tag = 'scoped memory for tpu_custom_call.1']
    #allocation5 [shape = 's32[1]{0}', space=sflag, size = 0x4, scoped, tag = 'scoped memory for tpu_custom_call.1']
    #allocation6 [shape = 'u8[12288]{0}', space=vmem, size = 0x3000, scoped, tag = 'output window, operand 0, single buffered']
    %9 = vsyncpa [#allocation4], 0
    %10 = vsyncpa [#allocation5], 0
    // Predicated region
    $region2: #{tpu_custom_call.1} parent=1 // pred_check
      _
    $region3: #{tpu_custom_call.1} parent=1 // pred_check_branch
      %12 = sbr.rel (0) target = $region5
    $region4: #{tpu_custom_call.1} parent=1 // pred_region
      %s14 = ssub.s32 1024, 1024
      %15 = vsyncadd [#allocation4], %s14
      %s16 = sshll.u32 [#allocation3], 4
      %s17 = int_to_ptr.vmem [resolvable:$true] %s16
      %22 = dma.hbm_to_vmem [thread:$0]  %s0, 1024, %s17, [#allocation4], 256, 256, 16
    $region5: #{tpu_custom_call.1} parent=1 // pred_fallthru
      _
    // Predicated region
    $region6: #{tpu_custom_call.1} parent=1 // pred_check
      _
    $region7: #{tpu_custom_call.1} parent=1 // pred_check_branch
      %24 = sbr.rel (0) target = $region9
    $region8: #{tpu_custom_call.1} parent=1 // pred_region
      _
    $region9: #{tpu_custom_call.1} parent=1 // pred_fallthru
      _
    // Predicated region
    $region10: #{tpu_custom_call.1} parent=1 // pred_check
      _
    $region11: #{tpu_custom_call.1} parent=1 // pred_check_branch
      %26 = sbr.rel (0) target = $region13
    $region12: #{tpu_custom_call.1} parent=1 // pred_region
      _
    $region13: #{tpu_custom_call.1} parent=1 // pred_fallthru
      _
    // Predicated region
    $region14: #{tpu_custom_call.1} parent=1 // pred_check
      _
    $region15: #{tpu_custom_call.1} parent=1 // pred_check_branch
      %28 = sbr.rel (0) target = $region17
    $region16: #{tpu_custom_call.1} parent=1 // pred_region
      _
    $region17: #{tpu_custom_call.1} parent=1 // pred_fallthru
      _
    // Predicated region
    $region18: #{tpu_custom_call.1} parent=1 // pred_check
      _
    $region19: #{tpu_custom_call.1} parent=1 // pred_check_branch
      %30 = sbr.rel (0) target = $region21
    $region20: #{tpu_custom_call.1} parent=1 // pred_region
      %31 = dma.done [#allocation4], 1024
    $region21: #{tpu_custom_call.1} parent=1 // pred_fallthru
      _
    %v33 = vld [vmem:[#allocation3] sm:$0xff]
    %v34 = vld [vmem:[#allocation3 + $0x8] sm:$0xf]
    %v35 = vld [vmem:[#allocation3 + $0x10] sm:$0xff]
    %v36 = vld [vmem:[#allocation3 + $0x18] sm:$0xf]
    %v41 = vunpack.c.l.b16 %v33
    %v42 = vunpack.c.h.b16 %v33
    %v43 = vunpack.c.l.b16 %v34
    %v44 = vunpack.c.l.b16 %v35
    %v45 = vunpack.c.h.b16 %v35
    %v46 = vunpack.c.l.b16 %v36
    %v47 = vpack.c.b16 %v44, %v41
    %v48 = vpack.c.b16 %v45, %v42
    %v49 = vpack.c.b16 %v46, %v43
    %53 = vst [vmem:[#allocation2] sm:$0xff] %v47
    %54 = vst [vmem:[#allocation2 + $0x8] sm:$0xff] %v48
    %55 = vst [vmem:[#allocation2 + $0x10] sm:$0xff] %v49
    %v56 = vld [vmem:[#allocation3] sm:$0xff]
    %v57 = vld [vmem:[#allocation3 + $0x8] sm:$0xff]
    %v58 = vld [vmem:[#allocation3 + $0x10] sm:$0xff]
    %v59 = vld [vmem:[#allocation3 + $0x18] sm:$0xff]
    %v64 = vunpack.c.l.b16 %v56
    %v65 = vunpack.c.h.b16 %v56
    %v66 = vunpack.c.l.b16 %v57
    %v67 = vunpack.c.h.b16 %v57
    %v68 = vunpack.c.l.b16 %v58
    %v69 = vunpack.c.h.b16 %v58
    %v70 = vunpack.c.l.b16 %v59
    %v71 = vunpack.c.h.b16 %v59
    %v72 = vpack.c.b16 %v68, %v64
    %v73 = vpack.c.b16 %v69, %v65
    %v74 = vpack.c.b16 %v70, %v66
    %v75 = vpack.c.b16 %v71, %v67
    %76 = vrot.lane.b32.xlu0 %v72, 127
    %v77 = vpop.permute.xlu0 %76
    %78 = vrot.lane.b32.xlu0 %v73, 127
    %v79 = vpop.permute.xlu0 %78
    %80 = vrot.lane.b32.xlu0 %v74, 127
    %v81 = vpop.permute.xlu0 %80
    %82 = vrot.lane.b32.xlu0 %v75, 127
    %v83 = vpop.permute.xlu0 %82
    %vm84 = vcmask 1039360
    %v85 = vsel %vm84, %v77, %v79
    %v86 = vsel %vm84, %v79, %v81
    %v87 = vsel %vm84, %v81, %v83
    %91 = vst [vmem:[#allocation2 + $0x30] sm:$0xff] %v85
    %92 = vst [vmem:[#allocation2 + $0x38] sm:$0xff] %v86
    %93 = vst [vmem:[#allocation2 + $0x40] sm:$0xff] %v87
    %v94 = vld [vmem:[#allocation3] sm:$0xff]
    %v95 = vld [vmem:[#allocation3 + $0x8] sm:$0xff]
    %v96 = vld [vmem:[#allocation3 + $0x10] sm:$0xff]
    %v97 = vld [vmem:[#allocation3 + $0x18] sm:$0xff]
    %v102 = vunpack.c.l.b16 %v94
    %v103 = vunpack.c.h.b16 %v94
    %v104 = vunpack.c.l.b16 %v95
    %v105 = vunpack.c.h.b16 %v95
    %v106 = vunpack.c.l.b16 %v96
    %v107 = vunpack.c.h.b16 %v96
    %v108 = vunpack.c.l.b16 %v97
    %v109 = vunpack.c.h.b16 %v97
    %v110 = vpack.c.b16 %v106, %v102
    %v111 = vpack.c.b16 %v107, %v103
    %v112 = vpack.c.b16 %v108, %v104
    %v113 = vpack.c.b16 %v109, %v105
    %114 = vrot.lane.b32.xlu0 %v110, 126
    %v115 = vpop.permute.xlu0 %114
    %116 = vrot.lane.b32.xlu0 %v111, 126
    %v117 = vpop.permute.xlu0 %116
    %118 = vrot.lane.b32.xlu0 %v112, 126
    %v119 = vpop.permute.xlu0 %118
    %120 = vrot.lane.b32.xlu0 %v113, 126
    %v121 = vpop.permute.xlu0 %120
    %vm122 = vcmask 1031168
    %v123 = vsel %vm122, %v115, %v117
    %v124 = vsel %vm122, %v117, %v119
    %v125 = vsel %vm122, %v119, %v121
    %129 = vst [vmem:[#allocation2 + $0x60] sm:$0xff] %v123
    %130 = vst [vmem:[#allocation2 + $0x68] sm:$0xff] %v124
    %131 = vst [vmem:[#allocation2 + $0x70] sm:$0xff] %v125
    %v132 = vld [vmem:[#allocation3] sm:$0xff]
    %v133 = vld [vmem:[#allocation3 + $0x8] sm:$0xff]
    %v134 = vld [vmem:[#allocation3 + $0x10] sm:$0xff]
    %v135 = vld [vmem:[#allocation3 + $0x18] sm:$0xff]
    %v140 = vunpack.c.l.b16 %v132
    %v141 = vunpack.c.h.b16 %v132
    %v142 = vunpack.c.l.b16 %v133
    %v143 = vunpack.c.h.b16 %v133
    %v144 = vunpack.c.l.b16 %v134
    %v145 = vunpack.c.h.b16 %v134
    %v146 = vunpack.c.l.b16 %v135
    %v147 = vunpack.c.h.b16 %v135
    %v148 = vpack.c.b16 %v144, %v140
    %v149 = vpack.c.b16 %v145, %v141
    %v150 = vpack.c.b16 %v146, %v142
    %v151 = vpack.c.b16 %v147, %v143
    %152 = vrot.lane.b32.xlu0 %v148, 110
    %v153 = vpop.permute.xlu0 %152
    %154 = vrot.lane.b32.xlu0 %v149, 110
    %v155 = vpop.permute.xlu0 %154
    %156 = vrot.lane.b32.xlu0 %v150, 110
    %v157 = vpop.permute.xlu0 %156
    %158 = vrot.lane.b32.xlu0 %v151, 110
    %v159 = vpop.permute.xlu0 %158
    %vm160 = vcmask 900096
    %v161 = vsel %vm160, %v153, %v155
    %v162 = vsel %vm160, %v155, %v157
    %v163 = vsel %vm160, %v157, %v159
    %167 = vst [vmem:[#allocation2 + $0x90] sm:$0xff] %v161
    %168 = vst [vmem:[#allocation2 + $0x98] sm:$0xff] %v162
    %169 = vst [vmem:[#allocation2 + $0xa0] sm:$0xff] %v163
    %v170 = vld [vmem:[#allocation3] sm:$0xff]
    %v171 = vld [vmem:[#allocation3 + $0x8] sm:$0xff]
    %v172 = vld [vmem:[#allocation3 + $0x10] sm:$0xff]
    %v173 = vld [vmem:[#allocation3 + $0x18] sm:$0xff]
    %v178 = vunpack.c.l.b16 %v170
    %v179 = vunpack.c.h.b16 %v170
    %v180 = vunpack.c.l.b16 %v171
    %v181 = vunpack.c.h.b16 %v171
    %v182 = vunpack.c.l.b16 %v172
    %v183 = vunpack.c.h.b16 %v172
    %v184 = vunpack.c.l.b16 %v173
    %v185 = vunpack.c.h.b16 %v173
    %v186 = vpack.c.b16 %v182, %v178
    %v187 = vpack.c.b16 %v183, %v179
    %v188 = vpack.c.b16 %v184, %v180
    %v189 = vpack.c.b16 %v185, %v181
    %190 = vrot.lane.b32.xlu0 %v186, 109
    %v191 = vpop.permute.xlu0 %190
    %192 = vrot.lane.b32.xlu0 %v187, 109
    %v193 = vpop.permute.xlu0 %192
    %194 = vrot.lane.b32.xlu0 %v188, 109
    %v195 = vpop.permute.xlu0 %194
    %196 = vrot.lane.b32.xlu0 %v189, 109
    %v197 = vpop.permute.xlu0 %196
    %vm198 = vcmask 891904
    %v199 = vsel %vm198, %v191, %v193
    %v200 = vsel %vm198, %v193, %v195
    %v201 = vsel %vm198, %v195, %v197
    %205 = vst [vmem:[#allocation2 + $0xc0] sm:$0xff] %v199
    %206 = vst [vmem:[#allocation2 + $0xc8] sm:$0xff] %v200
    %207 = vst [vmem:[#allocation2 + $0xd0] sm:$0xff] %v201
    %v208 = vld [vmem:[#allocation3] sm:$0xff]
    %v209 = vld [vmem:[#allocation3 + $0x8] sm:$0xff]
    %v210 = vld [vmem:[#allocation3 + $0x10] sm:$0xff]
    %v211 = vld [vmem:[#allocation3 + $0x18] sm:$0xff]
    %v216 = vunpack.c.l.b16 %v208
    %v217 = vunpack.c.h.b16 %v208
    %v218 = vunpack.c.l.b16 %v209
    %v219 = vunpack.c.h.b16 %v209
    %v220 = vunpack.c.l.b16 %v210
    %v221 = vunpack.c.h.b16 %v210
    %v222 = vunpack.c.l.b16 %v211
    %v223 = vunpack.c.h.b16 %v211
    %v224 = vpack.c.b16 %v220, %v216
    %v225 = vpack.c.b16 %v221, %v217
    %v226 = vpack.c.b16 %v222, %v218
    %v227 = vpack.c.b16 %v223, %v219
    %228 = vrot.lane.b32.xlu0 %v224, 108
    %v229 = vpop.permute.xlu0 %228
    %230 = vrot.lane.b32.xlu0 %v225, 108
    %v231 = vpop.permute.xlu0 %230
    %232 = vrot.lane.b32.xlu0 %v226, 108
    %v233 = vpop.permute.xlu0 %232
    %234 = vrot.lane.b32.xlu0 %v227, 108
    %v235 = vpop.permute.xlu0 %234
    %vm236 = vcmask 883712
    %v237 = vsel %vm236, %v229, %v231
    %v238 = vsel %vm236, %v231, %v233
    %v239 = vsel %vm236, %v233, %v235
    %243 = vst [vmem:[#allocation2 + $0xf0] sm:$0xff] %v237
    %244 = vst [vmem:[#allocation2 + $0xf8] sm:$0xff] %v238
    %245 = vst [vmem:[#allocation2 + $0x100] sm:$0xff] %v239
    %v246 = vld [vmem:[#allocation3] sm:$0xff]
    %v247 = vld [vmem:[#allocation3 + $0x8] sm:$0xff]
    %v248 = vld [vmem:[#allocation3 + $0x10] sm:$0xff]
    %v249 = vld [vmem:[#allocation3 + $0x18] sm:$0xff]
    %v254 = vunpack.c.l.b16 %v246
    %v255 = vunpack.c.h.b16 %v246
    %v256 = vunpack.c.l.b16 %v247
    %v257 = vunpack.c.h.b16 %v247
    %v258 = vunpack.c.l.b16 %v248
    %v259 = vunpack.c.h.b16 %v248
    %v260 = vunpack.c.l.b16 %v249
    %v261 = vunpack.c.h.b16 %v249
    %v262 = vpack.c.b16 %v258, %v254
    %v263 = vpack.c.b16 %v259, %v255
    %v264 = vpack.c.b16 %v260, %v256
    %v265 = vpack.c.b16 %v261, %v257
    %266 = vrot.lane.b32.xlu0 %v262, 92
    %v267 = vpop.permute.xlu0 %266
    %268 = vrot.lane.b32.xlu0 %v263, 92
    %v269 = vpop.permute.xlu0 %268
    %270 = vrot.lane.b32.xlu0 %v264, 92
    %v271 = vpop.permute.xlu0 %270
    %272 = vrot.lane.b32.xlu0 %v265, 92
    %v273 = vpop.permute.xlu0 %272
    %vm274 = vcmask 752640
    %v275 = vsel %vm274, %v267, %v269
    %v276 = vsel %vm274, %v269, %v271
    %v277 = vsel %vm274, %v271, %v273
    %281 = vst [vmem:[#allocation2 + $0x120] sm:$0xff] %v275
    %282 = vst [vmem:[#allocation2 + $0x128] sm:$0xff] %v276
    %283 = vst [vmem:[#allocation2 + $0x130] sm:$0xff] %v277
    %v284 = vld [vmem:[#allocation3] sm:$0xff]
    %v285 = vld [vmem:[#allocation3 + $0x8] sm:$0xff]
    %v286 = vld [vmem:[#allocation3 + $0x10] sm:$0xff]
    %v287 = vld [vmem:[#allocation3 + $0x18] sm:$0xff]
    %v292 = vunpack.c.l.b16 %v284
    %v293 = vunpack.c.h.b16 %v284
    %v294 = vunpack.c.l.b16 %v285
    %v295 = vunpack.c.h.b16 %v285
    %v296 = vunpack.c.l.b16 %v286
    %v297 = vunpack.c.h.b16 %v286
    %v298 = vunpack.c.l.b16 %v287
    %v299 = vunpack.c.h.b16 %v287
    %v300 = vpack.c.b16 %v296, %v292
    %v301 = vpack.c.b16 %v297, %v293
    %v302 = vpack.c.b16 %v298, %v294
    %v303 = vpack.c.b16 %v299, %v295
    %304 = vrot.lane.b32.xlu0 %v300, 91
    %v305 = vpop.permute.xlu0 %304
    %306 = vrot.lane.b32.xlu0 %v301, 91
    %v307 = vpop.permute.xlu0 %306
    %308 = vrot.lane.b32.xlu0 %v302, 91
    %v309 = vpop.permute.xlu0 %308
    %310 = vrot.lane.b32.xlu0 %v303, 91
    %v311 = vpop.permute.xlu0 %310
    %vm312 = vcmask 744448
    %v313 = vsel %vm312, %v305, %v307
    %v314 = vsel %vm312, %v307, %v309
    %v315 = vsel %vm312, %v309, %v311
    %319 = vst [vmem:[#allocation2 + $0x150] sm:$0xff] %v313
    %320 = vst [vmem:[#allocation2 + $0x158] sm:$0xff] %v314
    %321 = vst [vmem:[#allocation2 + $0x160] sm:$0xff] %v315
    %v322 = vld [vmem:[#allocation3] sm:$0xff]
    %v323 = vld [vmem:[#allocation3 + $0x8] sm:$0xff]
    %v324 = vld [vmem:[#allocation3 + $0x10] sm:$0xff]
    %v325 = vld [vmem:[#allocation3 + $0x18] sm:$0xff]
    %v330 = vunpack.c.l.b16 %v322
    %v331 = vunpack.c.h.b16 %v322
    %v332 = vunpack.c.l.b16 %v323
    %v333 = vunpack.c.h.b16 %v323
    %v334 = vunpack.c.l.b16 %v324
    %v335 = vunpack.c.h.b16 %v324
    %v336 = vunpack.c.l.b16 %v325
    %v337 = vunpack.c.h.b16 %v325
    %v338 = vpack.c.b16 %v334, %v330
    %v339 = vpack.c.b16 %v335, %v331
    %v340 = vpack.c.b16 %v336, %v332
    %v341 = vpack.c.b16 %v337, %v333
    %342 = vrot.lane.b32.xlu0 %v338, 90
    %v343 = vpop.permute.xlu0 %342
    %344 = vrot.lane.b32.xlu0 %v339, 90
    %v345 = vpop.permute.xlu0 %344
    %346 = vrot.lane.b32.xlu0 %v340, 90
    %v347 = vpop.permute.xlu0 %346
    %348 = vrot.lane.b32.xlu0 %v341, 90
    %v349 = vpop.permute.xlu0 %348
    %vm350 = vcmask 736256
    %v351 = vsel %vm350, %v343, %v345
    %v352 = vsel %vm350, %v345, %v347
    %v353 = vsel %vm350, %v347, %v349
    %357 = vst [vmem:[#allocation2 + $0x180] sm:$0xff] %v351
    %358 = vst [vmem:[#allocation2 + $0x188] sm:$0xff] %v352
    %359 = vst [vmem:[#allocation2 + $0x190] sm:$0xff] %v353
    %s360 = scalar_lea.vmem [#allocation3], 32
    %v361 = vld [vmem:[%s360] sm:$0xff]
    %v362 = vld [vmem:[%s360 + $0x8] sm:$0xf]
    %v363 = vld [vmem:[%s360 + $0x10] sm:$0xff]
    %v364 = vld [vmem:[%s360 + $0x18] sm:$0xf]
    %v369 = vunpack.c.l.b16 %v361
    %v370 = vunpack.c.h.b16 %v361
    %v371 = vunpack.c.l.b16 %v362
    %v372 = vunpack.c.l.b16 %v363
    %v373 = vunpack.c.h.b16 %v363
    %v374 = vunpack.c.l.b16 %v364
    %v375 = vpack.c.b16 %v372, %v369
    %v376 = vpack.c.b16 %v373, %v370
    %v377 = vpack.c.b16 %v374, %v371
    %381 = vst [vmem:[#allocation2 + $0x18] sm:$0xff] %v375
    %382 = vst [vmem:[#allocation2 + $0x20] sm:$0xff] %v376
    %383 = vst [vmem:[#allocation2 + $0x28] sm:$0xff] %v377
    %v384 = vld [vmem:[%s360] sm:$0xff]
    %v385 = vld [vmem:[%s360 + $0x8] sm:$0xff]
    %v386 = vld [vmem:[%s360 + $0x10] sm:$0xff]
    %v387 = vld [vmem:[%s360 + $0x18] sm:$0xff]
    %v392 = vunpack.c.l.b16 %v384
    %v393 = vunpack.c.h.b16 %v384
    %v394 = vunpack.c.l.b16 %v385
    %v395 = vunpack.c.h.b16 %v385
    %v396 = vunpack.c.l.b16 %v386
    %v397 = vunpack.c.h.b16 %v386
    %v398 = vunpack.c.l.b16 %v387
    %v399 = vunpack.c.h.b16 %v387
    %v400 = vpack.c.b16 %v396, %v392
    %v401 = vpack.c.b16 %v397, %v393
    %v402 = vpack.c.b16 %v398, %v394
    %v403 = vpack.c.b16 %v399, %v395
    %404 = vrot.lane.b32.xlu0 %v400, 127
    %v405 = vpop.permute.xlu0 %404
    %406 = vrot.lane.b32.xlu0 %v401, 127
    %v407 = vpop.permute.xlu0 %406
    %408 = vrot.lane.b32.xlu0 %v402, 127
    %v409 = vpop.permute.xlu0 %408
    %410 = vrot.lane.b32.xlu0 %v403, 127
    %v411 = vpop.permute.xlu0 %410
    %v412 = vsel %vm84, %v405, %v407
    %v413 = vsel %vm84, %v407, %v409
    %v414 = vsel %vm84, %v409, %v411
    %418 = vst [vmem:[#allocation2 + $0x48] sm:$0xff] %v412
    %419 = vst [vmem:[#allocation2 + $0x50] sm:$0xff] %v413
    %420 = vst [vmem:[#allocation2 + $0x58] sm:$0xff] %v414
    %v421 = vld [vmem:[%s360] sm:$0xff]
    %v422 = vld [vmem:[%s360 + $0x8] sm:$0xff]
    %v423 = vld [vmem:[%s360 + $0x10] sm:$0xff]
    %v424 = vld [vmem:[%s360 + $0x18] sm:$0xff]
    %v429 = vunpack.c.l.b16 %v421
    %v430 = vunpack.c.h.b16 %v421
    %v431 = vunpack.c.l.b16 %v422
    %v432 = vunpack.c.h.b16 %v422
    %v433 = vunpack.c.l.b16 %v423
    %v434 = vunpack.c.h.b16 %v423
    %v435 = vunpack.c.l.b16 %v424
    %v436 = vunpack.c.h.b16 %v424
    %v437 = vpack.c.b16 %v433, %v429
    %v438 = vpack.c.b16 %v434, %v430
    %v439 = vpack.c.b16 %v435, %v431
    %v440 = vpack.c.b16 %v436, %v432
    %441 = vrot.lane.b32.xlu0 %v437, 126
    %v442 = vpop.permute.xlu0 %441
    %443 = vrot.lane.b32.xlu0 %v438, 126
    %v444 = vpop.permute.xlu0 %443
    %445 = vrot.lane.b32.xlu0 %v439, 126
    %v446 = vpop.permute.xlu0 %445
    %447 = vrot.lane.b32.xlu0 %v440, 126
    %v448 = vpop.permute.xlu0 %447
    %v449 = vsel %vm122, %v442, %v444
    %v450 = vsel %vm122, %v444, %v446
    %v451 = vsel %vm122, %v446, %v448
    %455 = vst [vmem:[#allocation2 + $0x78] sm:$0xff] %v449
    %456 = vst [vmem:[#allocation2 + $0x80] sm:$0xff] %v450
    %457 = vst [vmem:[#allocation2 + $0x88] sm:$0xff] %v451
    %v458 = vld [vmem:[%s360] sm:$0xff]
    %v459 = vld [vmem:[%s360 + $0x8] sm:$0xff]
    %v460 = vld [vmem:[%s360 + $0x10] sm:$0xff]
    %v461 = vld [vmem:[%s360 + $0x18] sm:$0xff]
    %v466 = vunpack.c.l.b16 %v458
    %v467 = vunpack.c.h.b16 %v458
    %v468 = vunpack.c.l.b16 %v459
    %v469 = vunpack.c.h.b16 %v459
    %v470 = vunpack.c.l.b16 %v460
    %v471 = vunpack.c.h.b16 %v460
    %v472 = vunpack.c.l.b16 %v461
    %v473 = vunpack.c.h.b16 %v461
    %v474 = vpack.c.b16 %v470, %v466
    %v475 = vpack.c.b16 %v471, %v467
    %v476 = vpack.c.b16 %v472, %v468
    %v477 = vpack.c.b16 %v473, %v469
    %478 = vrot.lane.b32.xlu0 %v474, 110
    %v479 = vpop.permute.xlu0 %478
    %480 = vrot.lane.b32.xlu0 %v475, 110
    %v481 = vpop.permute.xlu0 %480
    %482 = vrot.lane.b32.xlu0 %v476, 110
    %v483 = vpop.permute.xlu0 %482
    %484 = vrot.lane.b32.xlu0 %v477, 110
    %v485 = vpop.permute.xlu0 %484
    %v486 = vsel %vm160, %v479, %v481
    %v487 = vsel %vm160, %v481, %v483
    %v488 = vsel %vm160, %v483, %v485
    %492 = vst [vmem:[#allocation2 + $0xa8] sm:$0xff] %v486
    %493 = vst [vmem:[#allocation2 + $0xb0] sm:$0xff] %v487
    %494 = vst [vmem:[#allocation2 + $0xb8] sm:$0xff] %v488
    %v495 = vld [vmem:[%s360] sm:$0xff]
    %v496 = vld [vmem:[%s360 + $0x8] sm:$0xff]
    %v497 = vld [vmem:[%s360 + $0x10] sm:$0xff]
    %v498 = vld [vmem:[%s360 + $0x18] sm:$0xff]
    %v503 = vunpack.c.l.b16 %v495
    %v504 = vunpack.c.h.b16 %v495
    %v505 = vunpack.c.l.b16 %v496
    %v506 = vunpack.c.h.b16 %v496
    %v507 = vunpack.c.l.b16 %v497
    %v508 = vunpack.c.h.b16 %v497
    %v509 = vunpack.c.l.b16 %v498
    %v510 = vunpack.c.h.b16 %v498
    %v511 = vpack.c.b16 %v507, %v503
    %v512 = vpack.c.b16 %v508, %v504
    %v513 = vpack.c.b16 %v509, %v505
    %v514 = vpack.c.b16 %v510, %v506
    %515 = vrot.lane.b32.xlu0 %v511, 109
    %v516 = vpop.permute.xlu0 %515
    %517 = vrot.lane.b32.xlu0 %v512, 109
    %v518 = vpop.permute.xlu0 %517
    %519 = vrot.lane.b32.xlu0 %v513, 109
    %v520 = vpop.permute.xlu0 %519
    %521 = vrot.lane.b32.xlu0 %v514, 109
    %v522 = vpop.permute.xlu0 %521
    %v523 = vsel %vm198, %v516, %v518
    %v524 = vsel %vm198, %v518, %v520
    %v525 = vsel %vm198, %v520, %v522
    %529 = vst [vmem:[#allocation2 + $0xd8] sm:$0xff] %v523
    %530 = vst [vmem:[#allocation2 + $0xe0] sm:$0xff] %v524
    %531 = vst [vmem:[#allocation2 + $0xe8] sm:$0xff] %v525
    %v532 = vld [vmem:[%s360] sm:$0xff]
    %v533 = vld [vmem:[%s360 + $0x8] sm:$0xff]
    %v534 = vld [vmem:[%s360 + $0x10] sm:$0xff]
    %v535 = vld [vmem:[%s360 + $0x18] sm:$0xff]
    %v540 = vunpack.c.l.b16 %v532
    %v541 = vunpack.c.h.b16 %v532
    %v542 = vunpack.c.l.b16 %v533
    %v543 = vunpack.c.h.b16 %v533
    %v544 = vunpack.c.l.b16 %v534
    %v545 = vunpack.c.h.b16 %v534
    %v546 = vunpack.c.l.b16 %v535
    %v547 = vunpack.c.h.b16 %v535
    %v548 = vpack.c.b16 %v544, %v540
    %v549 = vpack.c.b16 %v545, %v541
    %v550 = vpack.c.b16 %v546, %v542
    %v551 = vpack.c.b16 %v547, %v543
    %552 = vrot.lane.b32.xlu0 %v548, 108
    %v553 = vpop.permute.xlu0 %552
    %554 = vrot.lane.b32.xlu0 %v549, 108
    %v555 = vpop.permute.xlu0 %554
    %556 = vrot.lane.b32.xlu0 %v550, 108
    %v557 = vpop.permute.xlu0 %556
    %558 = vrot.lane.b32.xlu0 %v551, 108
    %v559 = vpop.permute.xlu0 %558
    %v560 = vsel %vm236, %v553, %v555
    %v561 = vsel %vm236, %v555, %v557
    %v562 = vsel %vm236, %v557, %v559
    %566 = vst [vmem:[#allocation2 + $0x108] sm:$0xff] %v560
    %567 = vst [vmem:[#allocation2 + $0x110] sm:$0xff] %v561
    %568 = vst [vmem:[#allocation2 + $0x118] sm:$0xff] %v562
    %v569 = vld [vmem:[%s360] sm:$0xff]
    %v570 = vld [vmem:[%s360 + $0x8] sm:$0xff]
    %v571 = vld [vmem:[%s360 + $0x10] sm:$0xff]
    %v572 = vld [vmem:[%s360 + $0x18] sm:$0xff]
    %v577 = vunpack.c.l.b16 %v569
    %v578 = vunpack.c.h.b16 %v569
    %v579 = vunpack.c.l.b16 %v570
    %v580 = vunpack.c.h.b16 %v570
    %v581 = vunpack.c.l.b16 %v571
    %v582 = vunpack.c.h.b16 %v571
    %v583 = vunpack.c.l.b16 %v572
    %v584 = vunpack.c.h.b16 %v572
    %v585 = vpack.c.b16 %v581, %v577
    %v586 = vpack.c.b16 %v582, %v578
    %v587 = vpack.c.b16 %v583, %v579
    %v588 = vpack.c.b16 %v584, %v580
    %589 = vrot.lane.b32.xlu0 %v585, 92
    %v590 = vpop.permute.xlu0 %589
    %591 = vrot.lane.b32.xlu0 %v586, 92
    %v592 = vpop.permute.xlu0 %591
    %593 = vrot.lane.b32.xlu0 %v587, 92
    %v594 = vpop.permute.xlu0 %593
    %595 = vrot.lane.b32.xlu0 %v588, 92
    %v596 = vpop.permute.xlu0 %595
    %v597 = vsel %vm274, %v590, %v592
    %v598 = vsel %vm274, %v592, %v594
    %v599 = vsel %vm274, %v594, %v596
    %603 = vst [vmem:[#allocation2 + $0x138] sm:$0xff] %v597
    %604 = vst [vmem:[#allocation2 + $0x140] sm:$0xff] %v598
    %605 = vst [vmem:[#allocation2 + $0x148] sm:$0xff] %v599
    %v606 = vld [vmem:[%s360] sm:$0xff]
    %v607 = vld [vmem:[%s360 + $0x8] sm:$0xff]
    %v608 = vld [vmem:[%s360 + $0x10] sm:$0xff]
    %v609 = vld [vmem:[%s360 + $0x18] sm:$0xff]
    %v614 = vunpack.c.l.b16 %v606
    %v615 = vunpack.c.h.b16 %v606
    %v616 = vunpack.c.l.b16 %v607
    %v617 = vunpack.c.h.b16 %v607
    %v618 = vunpack.c.l.b16 %v608
    %v619 = vunpack.c.h.b16 %v608
    %v620 = vunpack.c.l.b16 %v609
    %v621 = vunpack.c.h.b16 %v609
    %v622 = vpack.c.b16 %v618, %v614
    %v623 = vpack.c.b16 %v619, %v615
    %v624 = vpack.c.b16 %v620, %v616
    %v625 = vpack.c.b16 %v621, %v617
    %626 = vrot.lane.b32.xlu0 %v622, 91
    %v627 = vpop.permute.xlu0 %626
    %628 = vrot.lane.b32.xlu0 %v623, 91
    %v629 = vpop.permute.xlu0 %628
    %630 = vrot.lane.b32.xlu0 %v624, 91
    %v631 = vpop.permute.xlu0 %630
    %632 = vrot.lane.b32.xlu0 %v625, 91
    %v633 = vpop.permute.xlu0 %632
    %v634 = vsel %vm312, %v627, %v629
    %v635 = vsel %vm312, %v629, %v631
    %v636 = vsel %vm312, %v631, %v633
    %640 = vst [vmem:[#allocation2 + $0x168] sm:$0xff] %v634
    %641 = vst [vmem:[#allocation2 + $0x170] sm:$0xff] %v635
    %642 = vst [vmem:[#allocation2 + $0x178] sm:$0xff] %v636
    %v643 = vld [vmem:[%s360] sm:$0xff]
    %v644 = vld [vmem:[%s360 + $0x8] sm:$0xff]
    %v645 = vld [vmem:[%s360 + $0x10] sm:$0xff]
    %v646 = vld [vmem:[%s360 + $0x18] sm:$0xff]
    %v651 = vunpack.c.l.b16 %v643
    %v652 = vunpack.c.h.b16 %v643
    %v653 = vunpack.c.l.b16 %v644
    %v654 = vunpack.c.h.b16 %v644
    %v655 = vunpack.c.l.b16 %v645
    %v656 = vunpack.c.h.b16 %v645
    %v657 = vunpack.c.l.b16 %v646
    %v658 = vunpack.c.h.b16 %v646
    %v659 = vpack.c.b16 %v655, %v651
    %v660 = vpack.c.b16 %v656, %v652
    %v661 = vpack.c.b16 %v657, %v653
    %v662 = vpack.c.b16 %v658, %v654
    %663 = vrot.lane.b32.xlu0 %v659, 90
    %v664 = vpop.permute.xlu0 %663
    %665 = vrot.lane.b32.xlu0 %v660, 90
    %v666 = vpop.permute.xlu0 %665
    %667 = vrot.lane.b32.xlu0 %v661, 90
    %v668 = vpop.permute.xlu0 %667
    %669 = vrot.lane.b32.xlu0 %v662, 90
    %v670 = vpop.permute.xlu0 %669
    %v671 = vsel %vm350, %v664, %v666
    %v672 = vsel %vm350, %v666, %v668
    %v673 = vsel %vm350, %v668, %v670
    %677 = vst [vmem:[#allocation2 + $0x198] sm:$0xff] %v671
    %678 = vst [vmem:[#allocation2 + $0x1a0] sm:$0xff] %v672
    %679 = vst [vmem:[#allocation2 + $0x1a8] sm:$0xff] %v673
    %v680 = vld [vmem:[%s1] sm:$0xf]
    %v681 = vld [vmem:[#allocation2] sm:$0xff]
    %v682 = vld [vmem:[#allocation2 + $0x8] sm:$0xff]
    %v683 = vld [vmem:[#allocation2 + $0x10] sm:$0xff]
    %v684 = vld [vmem:[#allocation2 + $0x18] sm:$0xff]
    %v685 = vld [vmem:[#allocation2 + $0x20] sm:$0xff]
    %v686 = vld [vmem:[#allocation2 + $0x28] sm:$0xff]
    %v687 = vld [vmem:[#allocation2 + $0x30] sm:$0xff]
    %v688 = vld [vmem:[#allocation2 + $0x38] sm:$0xff]
    %v689 = vld [vmem:[#allocation2 + $0x40] sm:$0xff]
    %v690 = vld [vmem:[#allocation2 + $0x48] sm:$0xff]
    %v691 = vld [vmem:[#allocation2 + $0x50] sm:$0xff]
    %v692 = vld [vmem:[#allocation2 + $0x58] sm:$0xff]
    %v693 = vld [vmem:[#allocation2 + $0x60] sm:$0xff]
    %v694 = vld [vmem:[#allocation2 + $0x68] sm:$0xff]
    %v695 = vld [vmem:[#allocation2 + $0x70] sm:$0xff]
    %v696 = vld [vmem:[#allocation2 + $0x78] sm:$0xff]
    %v697 = vld [vmem:[#allocation2 + $0x80] sm:$0xff]
    %v698 = vld [vmem:[#allocation2 + $0x88] sm:$0xff]
    %v699 = vld [vmem:[#allocation2 + $0x90] sm:$0xff]
    %v700 = vld [vmem:[#allocation2 + $0x98] sm:$0xff]
    %v701 = vld [vmem:[#allocation2 + $0xa0] sm:$0xff]
    %v702 = vld [vmem:[#allocation2 + $0xa8] sm:$0xff]
    %v703 = vld [vmem:[#allocation2 + $0xb0] sm:$0xff]
    %v704 = vld [vmem:[#allocation2 + $0xb8] sm:$0xff]
    %v705 = vld [vmem:[#allocation2 + $0xc0] sm:$0xff]
    %v706 = vld [vmem:[#allocation2 + $0xc8] sm:$0xff]
    %v707 = vld [vmem:[#allocation2 + $0xd0] sm:$0xff]
    %v708 = vld [vmem:[#allocation2 + $0xd8] sm:$0xff]
    %v709 = vld [vmem:[#allocation2 + $0xe0] sm:$0xff]
    %v710 = vld [vmem:[#allocation2 + $0xe8] sm:$0xff]
    %v711 = vld [vmem:[#allocation2 + $0xf0] sm:$0xff]
    %v712 = vld [vmem:[#allocation2 + $0xf8] sm:$0xff]
    %v713 = vld [vmem:[#allocation2 + $0x100] sm:$0xff]
    %v714 = vld [vmem:[#allocation2 + $0x108] sm:$0xff]
    %v715 = vld [vmem:[#allocation2 + $0x110] sm:$0xff]
    %v716 = vld [vmem:[#allocation2 + $0x118] sm:$0xff]
    %v717 = vld [vmem:[#allocation2 + $0x120] sm:$0xff]
    %v718 = vld [vmem:[#allocation2 + $0x128] sm:$0xff]
    %v719 = vld [vmem:[#allocation2 + $0x130] sm:$0xff]
    %v720 = vld [vmem:[#allocation2 + $0x138] sm:$0xff]
    %v721 = vld [vmem:[#allocation2 + $0x140] sm:$0xff]
    %v722 = vld [vmem:[#allocation2 + $0x148] sm:$0xff]
    %v723 = vld [vmem:[#allocation2 + $0x150] sm:$0xff]
    %v724 = vld [vmem:[#allocation2 + $0x158] sm:$0xff]
    %v725 = vld [vmem:[#allocation2 + $0x160] sm:$0xff]
    %v726 = vld [vmem:[#allocation2 + $0x168] sm:$0xff]
    %v727 = vld [vmem:[#allocation2 + $0x170] sm:$0xff]
    %v728 = vld [vmem:[#allocation2 + $0x178] sm:$0xff]
    %v729 = vld [vmem:[#allocation2 + $0x180] sm:$0xff]
    %v730 = vld [vmem:[#allocation2 + $0x188] sm:$0xff]
    %v731 = vld [vmem:[#allocation2 + $0x190] sm:$0xff]
    %v732 = vld [vmem:[#allocation2 + $0x198] sm:$0xff]
    %v733 = vld [vmem:[#allocation2 + $0x1a0] sm:$0xff]
    %v734 = vld [vmem:[#allocation2 + $0x1a8] sm:$0xff]
    %v737 = vunpack.c.l.s4 1983009808
    %v738 = vunpack.c.0.s8 %v737
    %v739 = vlaneseq
    %v740 = vshrl.u32 %v739, 7
    %v741 = vsub.s32 %v738, %v740
    %v742 = vrot.slane %v680, %v741
    %v743 = vcombine.high %v742, %v742
    %vm745 = vcmask 130048
    %v747 = vsel %vm745, %v743, 0
    %749 = vmatprep.subr.bf16.mxu0 %v682
    %750 = vmatpush1.bf16.msra.mxu0 %v681
    %751 = vmatprep.subr.bf16.mxu0 %v688
    %752 = vmatpush1.bf16.msra.mxu0 %v687
    %753 = vmatprep.subr.bf16.mxu0 %v694
    %754 = vmatpush1.bf16.msra.mxu0 %v693
    %755 = vmatprep.subr.bf16.mxu0 %v700
    %756 = vmatpush1.bf16.msra.mxu0 %v699
    %757 = vmatprep.subr.bf16.mxu0 %v706
    %758 = vmatpush1.bf16.msra.mxu0 %v705
    %759 = vmatprep.subr.bf16.mxu0 %v712
    %760 = vmatpush1.bf16.msra.mxu0 %v711
    %761 = vmatprep.subr.bf16.mxu0 %v718
    %762 = vmatpush1.bf16.msra.mxu0 %v717
    %763 = vmatprep.subr.bf16.mxu0 %v724
    %764 = vmatpush1.bf16.msra.mxu0 %v723
    %765 = vmatprep.subr.bf16.mxu0 %v730
    %766 = vmatpush1.bf16.msra.mxu0 %v729
    %767 = vmatprep.subr.bf16.mxu0 0
    %768 = vmatpush1.bf16.msra.mxu0 0
    %769 = vmatprep.subr.bf16.mxu0 0
    %770 = vmatpush1.bf16.msra.mxu0 0
    %771 = vmatprep.subr.bf16.mxu0 0
    %772 = vmatpush1.bf16.msra.mxu0 0
    %773 = vmatprep.subr.bf16.mxu0 0
    %774 = vmatpush1.bf16.msra.mxu0 0
    %775 = vmatprep.subr.bf16.mxu0 0
    %776 = vmatpush1.bf16.msra.mxu0 0
    %777 = vmatprep.subr.bf16.mxu0 0
    %778 = vmatpush1.bf16.msra.mxu0 0
    %779 = vmatprep.subr.bf16.mxu0 0
    %780 = vmatpush1.bf16.msra.mxu0 0
    %781 = vmatprep.mubr.bf16.mxu0 %v747
    %782 = vmatmul.mubr.bf16.gmra.mrb[0].mxu0 %v742
    %v783 = vpop.f32.mrb[0].mxu0
    %v784 = vadd.f32 0.0, %v783
    %v785 = vpop.f32.mrb[0].mxu0
    %v786 = vadd.f32 0.0, %v785
    %v787 = vpop.f32.mrb[0].mxu0
    %v788 = vpop.f32.mrb[0].mxu0
    %789 = vdwg.mxu0
    %790 = vmatprep.subr.bf16.mxu0 %v684
    %791 = vmatpush1.bf16.msra.mxu0 %v683
    %792 = vmatprep.subr.bf16.mxu0 %v690
    %793 = vmatpush1.bf16.msra.mxu0 %v689
    %794 = vmatprep.subr.bf16.mxu0 %v696
    %795 = vmatpush1.bf16.msra.mxu0 %v695
    %796 = vmatprep.subr.bf16.mxu0 %v702
    %797 = vmatpush1.bf16.msra.mxu0 %v701
    %798 = vmatprep.subr.bf16.mxu0 %v708
    %799 = vmatpush1.bf16.msra.mxu0 %v707
    %800 = vmatprep.subr.bf16.mxu0 %v714
    %801 = vmatpush1.bf16.msra.mxu0 %v713
    %802 = vmatprep.subr.bf16.mxu0 %v720
    %803 = vmatpush1.bf16.msra.mxu0 %v719
    %804 = vmatprep.subr.bf16.mxu0 %v726
    %805 = vmatpush1.bf16.msra.mxu0 %v725
    %806 = vmatprep.subr.bf16.mxu0 %v732
    %807 = vmatpush1.bf16.msra.mxu0 %v731
    %808 = vmatprep.subr.bf16.mxu0 0
    %809 = vmatpush1.bf16.msra.mxu0 0
    %810 = vmatprep.subr.bf16.mxu0 0
    %811 = vmatpush1.bf16.msra.mxu0 0
    %812 = vmatprep.subr.bf16.mxu0 0
    %813 = vmatpush1.bf16.msra.mxu0 0
    %814 = vmatprep.subr.bf16.mxu0 0
    %815 = vmatpush1.bf16.msra.mxu0 0
    %816 = vmatprep.subr.bf16.mxu0 0
    %817 = vmatpush1.bf16.msra.mxu0 0
    %818 = vmatprep.subr.bf16.mxu0 0
    %819 = vmatpush1.bf16.msra.mxu0 0
    %820 = vmatprep.subr.bf16.mxu0 0
    %821 = vmatpush1.bf16.msra.mxu0 0
    %822 = vmatprep.mubr.bf16.mxu0 %v747
    %823 = vmatmul.mubr.bf16.gmra.mrb[0].mxu0 %v742
    %v824 = vpop.f32.mrb[0].mxu0
    %v825 = vadd.f32 0.0, %v824
    %v826 = vpop.f32.mrb[0].mxu0
    %v827 = vadd.f32 0.0, %v826
    %v828 = vpop.f32.mrb[0].mxu0
    %v829 = vpop.f32.mrb[0].mxu0
    %830 = vdwg.mxu0
    %831 = vmatprep.subr.bf16.mxu0 %v686
    %832 = vmatpush1.bf16.msra.mxu0 %v685
    %833 = vmatprep.subr.bf16.mxu0 %v692
    %834 = vmatpush1.bf16.msra.mxu0 %v691
    %835 = vmatprep.subr.bf16.mxu0 %v698
    %836 = vmatpush1.bf16.msra.mxu0 %v697
    %837 = vmatprep.subr.bf16.mxu0 %v704
    %838 = vmatpush1.bf16.msra.mxu0 %v703
    %839 = vmatprep.subr.bf16.mxu0 %v710
    %840 = vmatpush1.bf16.msra.mxu0 %v709
    %841 = vmatprep.subr.bf16.mxu0 %v716
    %842 = vmatpush1.bf16.msra.mxu0 %v715
    %843 = vmatprep.subr.bf16.mxu0 %v722
    %844 = vmatpush1.bf16.msra.mxu0 %v721
    %845 = vmatprep.subr.bf16.mxu0 %v728
    %846 = vmatpush1.bf16.msra.mxu0 %v727
    %847 = vmatprep.subr.bf16.mxu0 %v734
    %848 = vmatpush1.bf16.msra.mxu0 %v733
    %849 = vmatprep.subr.bf16.mxu0 0
    %850 = vmatpush1.bf16.msra.mxu0 0
    %851 = vmatprep.subr.bf16.mxu0 0
    %852 = vmatpush1.bf16.msra.mxu0 0
    %853 = vmatprep.subr.bf16.mxu0 0
    %854 = vmatpush1.bf16.msra.mxu0 0
    %855 = vmatprep.subr.bf16.mxu0 0
    %856 = vmatpush1.bf16.msra.mxu0 0
    %857 = vmatprep.subr.bf16.mxu0 0
    %858 = vmatpush1.bf16.msra.mxu0 0
    %859 = vmatprep.subr.bf16.mxu0 0
    %860 = vmatpush1.bf16.msra.mxu0 0
    %861 = vmatprep.subr.bf16.mxu0 0
    %862 = vmatpush1.bf16.msra.mxu0 0
    %863 = vmatprep.mubr.bf16.mxu0 %v747
    %864 = vmatmul.mubr.bf16.gmra.mrb[0].mxu0 %v742
    %v865 = vpop.f32.mrb[0].mxu0
    %v866 = vadd.f32 0.0, %v865
    %v867 = vpop.f32.mrb[0].mxu0
    %v868 = vadd.f32 0.0, %v867
    %v869 = vpop.f32.mrb[0].mxu0
    %v870 = vpop.f32.mrb[0].mxu0
    %871 = vdwg.mxu0
    %v872 = vld [vmem:[%s2] sm:$0xf]
    %874 = vset.pattern.permute.xlu0 0
    %875 = vperm.xlu0 %874, %v872
    %v876 = vpop.permute.xlu0 %875
    %v878 = vmul.f32 %v784, %v876
    %v879 = vmul.f32 %v786, %v876
    %v880 = vmul.f32 %v825, %v876
    %v881 = vmul.f32 %v827, %v876
    %v882 = vmul.f32 %v866, %v876
    %v883 = vmul.f32 %v868, %v876
    %v884 = vld [vmem:[%s3] sm:$0xf]
    %886 = vset.pattern.permute.xlu0 0
    %887 = vperm.xlu0 %886, %v884
    %v888 = vpop.permute.xlu0 %887
    %v890 = vadd.f32 %v878, %v888
    %v891 = vadd.f32 %v879, %v888
    %v892 = vadd.f32 %v880, %v888
    %v893 = vadd.f32 %v881, %v888
    %v894 = vadd.f32 %v882, %v888
    %v895 = vadd.f32 %v883, %v888
    %v896 = vmax.f32 %v890, 0.0
    %v897 = vmax.f32 %v891, 0.0
    %v898 = vmax.f32 %v892, 0.0
    %v899 = vmax.f32 %v893, 0.0
    %v900 = vmax.f32 %v894, 0.0
    %v901 = vmax.f32 %v895, 0.0
    %v904 = vcombine.low %v896, %v897
    %906 = vst [vmem:[#allocation6] sm:$0xff] %v904
    %907 = vst [vmem:[#allocation6 + $0x8] sm:$0xf] %v898
    %v910 = vcombine.low %v899, %v900
    %s912 = scalar_lea.vmem [#allocation6], 12
    %913 = vst [vmem:[%s912] sm:$0xff] %v910
    %914 = vst [vmem:[%s912 + $0x8] sm:$0xf] %v901
    // Predicated region
    $region22: #{tpu_custom_call.1} parent=1 // pred_check
      _
    $region23: #{tpu_custom_call.1} parent=1 // pred_check_branch
      %916 = sbr.rel (0) target = $region25
    $region24: #{tpu_custom_call.1} parent=1 // pred_region
      %s918 = ssub.s32 384, 384
      %919 = vsyncadd [#allocation5], %s918
      %s920 = sshll.u32 [#allocation6], 4
      %s921 = int_to_ptr.vmem [resolvable:$true] %s920
      %926 = dma.vmem_to_hbm [thread:$0]  %s921, 384, %s4, [#allocation5], 192, 192, 12
    $region25: #{tpu_custom_call.1} parent=1 // pred_fallthru
      _
    // Predicated region
    $region26: #{tpu_custom_call.1} parent=1 // pred_check
      _
    $region27: #{tpu_custom_call.1} parent=1 // pred_check_branch
      %928 = sbr.rel (0) target = $region29
    $region28: #{tpu_custom_call.1} parent=1 // pred_region
      %929 = dma.done [#allocation5], 384
    $region29: #{tpu_custom_call.1} parent=1 // pred_fallthru
      _
    %930 = vsyncpa [#allocation4], 1
    %931 = vsyncpa [#allocation5], 1

</llo_original>
